<compile_context>
chip_gen: v5e
topology: v5e:2x2
jax: 0.10.0
libtpu: 0.0.40
codegen_flags: <defaults>
</compile_context>

<pallas_src>
import jax
import jax.numpy as jnp
from jax import lax
from jax.experimental import pallas as pl
from jax.experimental.pallas import tpu as pltpu


def _discriminator_kernel(x_ref, w1t_ref, b1t_ref, w2t_ref, b2t_ref,
                          w3t_ref, b3t_ref, ot_ref):
    # grad_reverse: identity in forward. Dropout: identity (eval mode).
    # Cast x to bf16 in-kernel (saves a full XLA pass over x in HBM).
    xb = x_ref[...].astype(jnp.bfloat16)                       # (TB, d0)

    # Layer 1, transposed layout: (d1, d0) x (TB, d0)^T -> (d1, TB), f32 acc.
    h1 = lax.dot_general(w1t_ref[...], xb,
                         dimension_numbers=(((1,), (1,)), ((), ())),
                         preferred_element_type=jnp.float32)
    h1 = jnp.maximum(h1 + b1t_ref[...], 0.0)                   # f32, lane-dense

    # Layer 2: (d2, d1) x (d1, TB) -> (d2, TB).
    h2 = lax.dot_general(w2t_ref[...], h1.astype(jnp.bfloat16),
                         dimension_numbers=(((1,), (0,)), ((), ())),
                         preferred_element_type=jnp.float32)
    h2 = jnp.maximum(h2 + b2t_ref[...], 0.0)

    # Layer 3: (d3, d2) x (d2, TB) -> (d3, TB), batch on the lane axis.
    out_t = lax.dot_general(w3t_ref[...], h2.astype(jnp.bfloat16),
                            dimension_numbers=(((1,), (0,)), ((), ())),
                            preferred_element_type=jnp.float32)
    ot_ref[...] = (out_t + b3t_ref[...]).astype(ot_ref.dtype)


def prepare_params(params):
    """One-time preprocessing: transposed bf16 weights, f32 column biases."""
    prep = {}
    for i in (1, 2, 3):
        prep[f"w{i}t"] = jnp.transpose(params[f"w{i}"]).astype(jnp.bfloat16)
        prep[f"b{i}t"] = jnp.reshape(params[f"b{i}"], (-1, 1)).astype(jnp.float32)
    return prep


def discriminator_forward(x, prep, *, block_b=2048, output_transposed=False):
    """x: (B, d0) float32. prep: output of prepare_params().

    Returns (B, d3) f32 (module layout), or (d3, B) if output_transposed=True.
    """
    B, d0 = x.shape
    d1 = prep["w1t"].shape[0]
    d2 = prep["w2t"].shape[0]
    d3 = prep["w3t"].shape[0]

    # Batch tile: multiple of 128 (lane-dense transposed output), large enough
    # to amortize per-step overhead, but capped so grid_b >= 2 when B allows
    # (keeps both TensorCores fed on v7x).
    max_tb = max(128, (block_b // 128) * 128)
    half_b = (((B + 1) // 2) + 127) // 128 * 128
    TB = max(128, min(max_tb, half_b))
    grid_b = pl.cdiv(B, TB)

    flops = 2 * B * (d0 * d1 + d1 * d2 + d2 * d3)
    bytes_accessed = (B * d0 * 4 + B * d3 * 4
                      + (d0 * d1 + d1 * d2 + d2 * d3) * 2
                      + (d1 + d2 + d3) * 4)

    out_t = pl.pallas_call(
        _discriminator_kernel,
        out_shape=jax.ShapeDtypeStruct((d3, B), jnp.float32),
        grid=(grid_b,),
        in_specs=[
            pl.BlockSpec((TB, d0), lambda i: (i, 0)),   # x: tiled over batch (f32)
            pl.BlockSpec((d1, d0), lambda i: (0, 0)),   # w1^T (bf16, VMEM-resident)
            pl.BlockSpec((d1, 1), lambda i: (0, 0)),    # b1 (column)
            pl.BlockSpec((d2, d1), lambda i: (0, 0)),   # w2^T
            pl.BlockSpec((d2, 1), lambda i: (0, 0)),    # b2 (column)
            pl.BlockSpec((d3, d2), lambda i: (0, 0)),   # w3^T
            pl.BlockSpec((d3, 1), lambda i: (0, 0)),    # b3 (column)
        ],
        out_specs=pl.BlockSpec((d3, TB), lambda i: (0, i)),  # lane-dense batch
        compiler_params=pltpu.CompilerParams(
            dimension_semantics=("parallel",)),
        cost_estimate=pl.CostEstimate(
            flops=flops, bytes_accessed=bytes_accessed, transcendentals=0),
    )(x, prep["w1t"], prep["b1t"], prep["w2t"], prep["b2t"],
      prep["w3t"], prep["b3t"])

    if output_transposed:
        return out_t                    # (d3, B), no extra relayout pass
    return jnp.transpose(out_t)         # (B, d3), module layout


def init_params(key, dims):
    """Deterministic init matching nn.Linear shapes (stored as (in, out))."""
    assert len(dims) == 4, "Discriminator input dims should be four dim!"
    keys = jax.random.split(key, 6)
    params = {}
    for i, (din, dout) in enumerate(zip(dims[:-1], dims[1:]), start=1):
        bound = 1.0 / jnp.sqrt(din)
        params[f"w{i}"] = jax.random.uniform(
            keys[2 * (i - 1)], (din, dout), jnp.float32, -bound, bound)
        params[f"b{i}"] = jax.random.uniform(
            keys[2 * (i - 1) + 1], (1, dout), jnp.float32, -bound, bound)
    return params


def discriminator_ref(x, params):
    """Pure-JAX reference mirroring the kernel's dtype handling (bf16 in, f32 acc)."""
    bf = jnp.bfloat16
    h = jnp.dot(x.astype(bf), params["w1"].astype(bf),
                preferred_element_type=jnp.float32) + params["b1"]
    h = jnp.maximum(h, 0.0)
    h = jnp.dot(h.astype(bf), params["w2"].astype(bf),
                preferred_element_type=jnp.float32) + params["b2"]
    h = jnp.maximum(h, 0.0)
    out = jnp.dot(h.astype(bf), params["w3"].astype(bf),
                  preferred_element_type=jnp.float32) + params["b3"]
    return out


if __name__ == "__main__":
    key = jax.random.PRNGKey(0)
    dims = (32, 64, 64, 2)          # (in, hidden1, hidden2, out)
    B = 300                          # not a multiple of the tile -> ragged tail + 2 grid steps

    kx, kp = jax.random.split(key)
    x = jax.random.normal(kx, (B, dims[0]), jnp.float32)
    params = init_params(kp, dims)
    prep = prepare_params(params)    # one-time weight prep (hoisted out of forward)

    out = discriminator_forward(x, prep, block_b=2048)
    out = jax.block_until_ready(out)

    ref = discriminator_ref(x, params)
    assert out.shape == (B, dims[3])
    assert jnp.allclose(out, ref, atol=1e-3, rtol=1e-3), "mismatch vs reference"

    print("KERNEL_OK")
</pallas_src>

<mosaic_0001>
module attributes {stable_mosaic.version = 11 : i64} {
  func.func @_discriminator_kernel(%arg0: i32, %arg1: memref<256x32xf32, #tpu.memory_space<vmem>>, %arg2: memref<64x32xbf16, #tpu.memory_space<vmem>>, %arg3: memref<64x1xf32, #tpu.memory_space<vmem>>, %arg4: memref<64x64xbf16, #tpu.memory_space<vmem>>, %arg5: memref<64x1xf32, #tpu.memory_space<vmem>>, %arg6: memref<2x64xbf16, #tpu.memory_space<vmem>>, %arg7: memref<2x1xf32, #tpu.memory_space<vmem>>, %arg8: memref<2x256xf32, #tpu.memory_space<vmem>>) attributes {dimension_semantics = [#tpu.dimension_semantics<parallel>], iteration_bounds = array<i64: 2>, scalar_prefetch = 0 : i64, scratch_operands = 0 : i64, tpu.core_type = #tpu.core_type<tc>, window_params = [{transform_indices = @transform_0, window_bounds = array<i64: 256, 32>}, {pipeline_mode = #tpu.pipeline_mode<synchronous>, transform_indices = @transform_1, window_bounds = array<i64: 64, 32>}, {pipeline_mode = #tpu.pipeline_mode<synchronous>, transform_indices = @transform_2, window_bounds = array<i64: 64, 1>}, {pipeline_mode = #tpu.pipeline_mode<synchronous>, transform_indices = @transform_3, window_bounds = array<i64: 64, 64>}, {pipeline_mode = #tpu.pipeline_mode<synchronous>, transform_indices = @transform_4, window_bounds = array<i64: 64, 1>}, {pipeline_mode = #tpu.pipeline_mode<synchronous>, transform_indices = @transform_5, window_bounds = array<i64: 2, 64>}, {pipeline_mode = #tpu.pipeline_mode<synchronous>, transform_indices = @transform_6, window_bounds = array<i64: 2, 1>}, {transform_indices = @transform_7, window_bounds = array<i64: 2, 256>}]} {
    %c0 = arith.constant 0 : index
    %c0_0 = arith.constant 0 : index
    %0 = vector.load %arg1[%c0, %c0_0] : memref<256x32xf32, #tpu.memory_space<vmem>>, vector<256x32xf32>
    %1 = arith.truncf %0 : vector<256x32xf32> to vector<256x32xbf16>
    %c0_1 = arith.constant 0 : index
    %c0_2 = arith.constant 0 : index
    %2 = vector.load %arg2[%c0_1, %c0_2] : memref<64x32xbf16, #tpu.memory_space<vmem>>, vector<64x32xbf16>
    %cst = arith.constant dense<0.000000e+00> : vector<64x256xf32>
    %3 = tpu.matmul %2, %1, %cst {dimension_numbers = #tpu.dot_dimension_numbers<[1], [1], [0], [0], [0, 0, 1, 0], [], []>} : vector<64x32xbf16>, vector<256x32xbf16>, vector<64x256xf32> -> vector<64x256xf32>
    %c0_3 = arith.constant 0 : index
    %c0_4 = arith.constant 0 : index
    %4 = vector.load %arg3[%c0_3, %c0_4] : memref<64x1xf32, #tpu.memory_space<vmem>>, vector<64x1xf32>
    %5 = vector.broadcast %4 : vector<64x1xf32> to vector<64x256xf32>
    %6 = arith.addf %3, %5 : vector<64x256xf32>
    %cst_5 = arith.constant 0.000000e+00 : f32
    %7 = vector.broadcast %cst_5 : f32 to vector<64x256xf32>
    %8 = arith.maximumf %6, %7 : vector<64x256xf32>
    %c0_6 = arith.constant 0 : index
    %c0_7 = arith.constant 0 : index
    %9 = vector.load %arg4[%c0_6, %c0_7] : memref<64x64xbf16, #tpu.memory_space<vmem>>, vector<64x64xbf16>
    %10 = arith.truncf %8 : vector<64x256xf32> to vector<64x256xbf16>
    %cst_8 = arith.constant dense<0.000000e+00> : vector<64x256xf32>
    %11 = tpu.matmul %9, %10, %cst_8 {dimension_numbers = #tpu.dot_dimension_numbers<[1], [0], [0], [1], [0, 0, 1, 1], [], []>} : vector<64x64xbf16>, vector<64x256xbf16>, vector<64x256xf32> -> vector<64x256xf32>
    %c0_9 = arith.constant 0 : index
    %c0_10 = arith.constant 0 : index
    %12 = vector.load %arg5[%c0_9, %c0_10] : memref<64x1xf32, #tpu.memory_space<vmem>>, vector<64x1xf32>
    %13 = vector.broadcast %12 : vector<64x1xf32> to vector<64x256xf32>
    %14 = arith.addf %11, %13 : vector<64x256xf32>
    %cst_11 = arith.constant 0.000000e+00 : f32
    %15 = vector.broadcast %cst_11 : f32 to vector<64x256xf32>
    %16 = arith.maximumf %14, %15 : vector<64x256xf32>
    %c0_12 = arith.constant 0 : index
    %c0_13 = arith.constant 0 : index
    %17 = vector.load %arg6[%c0_12, %c0_13] : memref<2x64xbf16, #tpu.memory_space<vmem>>, vector<2x64xbf16>
    %18 = arith.truncf %16 : vector<64x256xf32> to vector<64x256xbf16>
    %cst_14 = arith.constant dense<0.000000e+00> : vector<2x256xf32>
    %19 = tpu.matmul %17, %18, %cst_14 {dimension_numbers = #tpu.dot_dimension_numbers<[1], [0], [0], [1], [0, 0, 1, 1], [], []>} : vector<2x64xbf16>, vector<64x256xbf16>, vector<2x256xf32> -> vector<2x256xf32>
    %c0_15 = arith.constant 0 : index
    %c0_16 = arith.constant 0 : index
    %20 = vector.load %arg7[%c0_15, %c0_16] : memref<2x1xf32, #tpu.memory_space<vmem>>, vector<2x1xf32>
    %21 = vector.broadcast %20 : vector<2x1xf32> to vector<2x256xf32>
    %22 = arith.addf %19, %21 : vector<2x256xf32>
    %c0_17 = arith.constant 0 : index
    %c0_18 = arith.constant 0 : index
    %23 = vector.load %arg8[%c0_17, %c0_18] : memref<2x256xf32, #tpu.memory_space<vmem>>, vector<2x256xf32>
    tpu.vector_store %arg8[%c0_17, %c0_18], %22 {strides = array<i32>} : memref<2x256xf32, #tpu.memory_space<vmem>>, vector<2x256xf32>,
    return
  }
  func.func @transform_0(%arg0: i32) -> (i32, i32) {
    %c0_i32 = arith.constant 0 : i32
    %c0_i32_0 = arith.constant 0 : i32
    return %arg0, %c0_i32 : i32, i32
  }
  func.func @transform_1(%arg0: i32) -> (i32, i32) {
    %c0_i32 = arith.constant 0 : i32
    %c0_i32_0 = arith.constant 0 : i32
    %c0_i32_1 = arith.constant 0 : i32
    return %c0_i32, %c0_i32_0 : i32, i32
  }
  func.func @transform_2(%arg0: i32) -> (i32, i32) {
    %c0_i32 = arith.constant 0 : i32
    %c0_i32_0 = arith.constant 0 : i32
    %c0_i32_1 = arith.constant 0 : i32
    return %c0_i32, %c0_i32_0 : i32, i32
  }
  func.func @transform_3(%arg0: i32) -> (i32, i32) {
    %c0_i32 = arith.constant 0 : i32
    %c0_i32_0 = arith.constant 0 : i32
    %c0_i32_1 = arith.constant 0 : i32
    return %c0_i32, %c0_i32_0 : i32, i32
  }
  func.func @transform_4(%arg0: i32) -> (i32, i32) {
    %c0_i32 = arith.constant 0 : i32
    %c0_i32_0 = arith.constant 0 : i32
    %c0_i32_1 = arith.constant 0 : i32
    return %c0_i32, %c0_i32_0 : i32, i32
  }
  func.func @transform_5(%arg0: i32) -> (i32, i32) {
    %c0_i32 = arith.constant 0 : i32
    %c0_i32_0 = arith.constant 0 : i32
    %c0_i32_1 = arith.constant 0 : i32
    return %c0_i32, %c0_i32_0 : i32, i32
  }
  func.func @transform_6(%arg0: i32) -> (i32, i32) {
    %c0_i32 = arith.constant 0 : i32
    %c0_i32_0 = arith.constant 0 : i32
    %c0_i32_1 = arith.constant 0 : i32
    return %c0_i32, %c0_i32_0 : i32, i32
  }
  func.func @transform_7(%arg0: i32) -> (i32, i32) {
    %c0_i32 = arith.constant 0 : i32
    %c0_i32_0 = arith.constant 0 : i32
    return %c0_i32, %arg0 : i32, i32
  }
}

</mosaic_0001>

<llo_original>
// kernel: tpu_custom_call.1
$region0: #{tpu_custom_call.1}
  #allocation0 [shape = 'u32[]', space=smem, size = 0x4, offset = 0x4, fixed_abs, tag = 'smem constant byte address 0x4 - core index']
  #allocation1 [shape = 'u32[72,128]{1,0:T(1,128)}', space=vmem, size = 0x9000, scoped, tag = 'internal scratch']
  %s0 = inlined_call_operand.vmem [shape: f32[300,32], index: 0, kind: input, shape index: {}]
  %s1 = inlined_call_operand.vmem [shape: bf16[64,32], index: 1, kind: input, shape index: {}]
  %s2 = inlined_call_operand.vmem [shape: f32[64,1], index: 2, kind: input, shape index: {}]
  %s3 = inlined_call_operand.vmem [shape: bf16[64,64], index: 3, kind: input, shape index: {}]
  %s4 = inlined_call_operand.vmem [shape: f32[64,1], index: 4, kind: input, shape index: {}]
  %s5 = inlined_call_operand.vmem [shape: bf16[2,64], index: 5, kind: input, shape index: {}]
  %s6 = inlined_call_operand.vmem [shape: f32[2,1], index: 6, kind: input, shape index: {}]
  %s7 = inlined_call_operand.hbm [shape: f32[2,300], index: 7, kind: output, shape index: {}]
  %s8 = sld [smem:[#allocation0]]
  $region61: #{tpu_custom_call.1} parent=0
    _
  %s10 = ssub.s32 1, %s8
  %s11 = scalar_select 0, %s10, %s8
  $region1: #{tpu_custom_call.1} parent=0
    #allocation2 [shape = 'u8[4096]{0}', space=vmem, size = 0x1000, scoped, tag = 'output window, operand 0']
    #allocation3 [shape = 's32[2]{0}', space=sflag, size = 0x8, scoped, tag = 'scoped memory for tpu_custom_call.1']
    %12 = vsyncpa [#allocation3], 0
    %s13 = scalar_lea.sflag [#allocation3], 1
    %14 = vsyncpa %s13, 0
    loop: start=0, step=1, limit=4
    $region2: #{tpu_custom_call.1} parent=1 // loop_pre_header
      _
    $region3: #{tpu_custom_call.1} parent=1 // loop_header
      %s16 = sphi 0, %s20
      %p17 = scmp.ge.s32.totalorder %s16, 4
      %s26 = sphi 0, %s28
      %s29 = sphi 0, %s26
      %s30 = sphi 0, %s29
      %s46 = sphi 0, %s30
      %s50 = sphi 0, %s50
      %s52 = sphi 0, %s50
      %s53 = sphi 0, %s52
      %s67 = sphi 0, %s53
      %s71 = sphi 0, %s71
      %s73 = sphi 0, %s71
      %s74 = sphi 0, %s73
      %s88 = sphi 0, %s74
      %s92 = sphi 0, %s92
      %s94 = sphi 0, %s92
      %s95 = sphi 0, %s94
      %s109 = sphi 0, %s95
      %s113 = sphi 0, %s113
      %s115 = sphi 0, %s113
      %s116 = sphi 0, %s115
      %s130 = sphi 0, %s116
      %s134 = sphi 0, %s134
      %s136 = sphi 0, %s134
      %s137 = sphi 0, %s136
      %s151 = sphi 0, %s137
      %s155 = sphi 0, %s155
      %s157 = sphi 0, %s155
      %s158 = sphi 0, %s157
      %s172 = sphi 0, %s158
      %s178 = sphi 0, %s180
      %s181 = sphi 0, %s178
      %s182 = sphi 0, %s181
      %s198 = sphi 0, %s182
    $region4: #{tpu_custom_call.1} parent=1 // loop_header_branch
      %19 = sbr.rel (%p17) target = $region8
    $region5: #{tpu_custom_call.1} parent=1 // loop_body
      %s21 = ssub.s32 %s16, 1
      %s22 = ssub.s32 %s16, 2
      %s23 = sadd.s32 %s16, 1
      %s24 = ssub.s32 %s16, %s23
      %p25 = scmp.eq.s32.totalorder %s24, 0
      %s27 = sadd.s32 %s26, 1
      %s28 = scalar_select %p25, %s26, %s27
      %p31 = pneg %p25
      %p32 = scmp.eq.s32.totalorder %s16, 1
      %p33 = por %p31, %p32
      %p34 = scmp.ne.s32.totalorder %s26, %s29
      %p35 = scmp.eq.s32.totalorder %s16, 0
      %p36 = por %p34, %p35
      %p37 = scmp.ne.s32.totalorder %s26, %s29
      %p38 = scmp.eq.s32.totalorder %s21, 1
      %p39 = por %p37, %p38
      %p40 = scmp.ne.s32.totalorder %s29, %s30
      %p41 = scmp.eq.s32.totalorder %s21, 0
      %p42 = por %p40, %p41
      %p43 = scmp.ne.s32.totalorder %s29, %s30
      %p44 = scmp.eq.s32.totalorder %s22, 1
      %p45 = por %p43, %p44
      %p47 = scmp.ne.s32.totalorder %s30, %s46
      %p48 = scmp.eq.s32.totalorder %s22, 0
      %p49 = por %p47, %p48
      %s51 = sadd.s32 %s50, 1
      %p54 = scmp.eq.s32.totalorder %s16, 1
      %p55 = scmp.ne.s32.totalorder %s50, %s52
      %p56 = scmp.eq.s32.totalorder %s16, 0
      %p57 = por %p55, %p56
      %p58 = scmp.ne.s32.totalorder %s50, %s52
      %p59 = scmp.eq.s32.totalorder %s21, 1
      %p60 = por %p58, %p59
      %p61 = scmp.ne.s32.totalorder %s52, %s53
      %p62 = scmp.eq.s32.totalorder %s21, 0
      %p63 = por %p61, %p62
      %p64 = scmp.ne.s32.totalorder %s52, %s53
      %p65 = scmp.eq.s32.totalorder %s22, 1
      %p66 = por %p64, %p65
      %p68 = scmp.ne.s32.totalorder %s53, %s67
      %p69 = scmp.eq.s32.totalorder %s22, 0
      %p70 = por %p68, %p69
      %s72 = sadd.s32 %s71, 1
      %p75 = scmp.eq.s32.totalorder %s16, 1
      %p76 = scmp.ne.s32.totalorder %s71, %s73
      %p77 = scmp.eq.s32.totalorder %s16, 0
      %p78 = por %p76, %p77
      %p79 = scmp.ne.s32.totalorder %s71, %s73
      %p80 = scmp.eq.s32.totalorder %s21, 1
      %p81 = por %p79, %p80
      %p82 = scmp.ne.s32.totalorder %s73, %s74
      %p83 = scmp.eq.s32.totalorder %s21, 0
      %p84 = por %p82, %p83
      %p85 = scmp.ne.s32.totalorder %s73, %s74
      %p86 = scmp.eq.s32.totalorder %s22, 1
      %p87 = por %p85, %p86
      %p89 = scmp.ne.s32.totalorder %s74, %s88
      %p90 = scmp.eq.s32.totalorder %s22, 0
      %p91 = por %p89, %p90
      %s93 = sadd.s32 %s92, 1
      %p96 = scmp.eq.s32.totalorder %s16, 1
      %p97 = scmp.ne.s32.totalorder %s92, %s94
      %p98 = scmp.eq.s32.totalorder %s16, 0
      %p99 = por %p97, %p98
      %p100 = scmp.ne.s32.totalorder %s92, %s94
      %p101 = scmp.eq.s32.totalorder %s21, 1
      %p102 = por %p100, %p101
      %p103 = scmp.ne.s32.totalorder %s94, %s95
      %p104 = scmp.eq.s32.totalorder %s21, 0
      %p105 = por %p103, %p104
      %p106 = scmp.ne.s32.totalorder %s94, %s95
      %p107 = scmp.eq.s32.totalorder %s22, 1
      %p108 = por %p106, %p107
      %p110 = scmp.ne.s32.totalorder %s95, %s109
      %p111 = scmp.eq.s32.totalorder %s22, 0
      %p112 = por %p110, %p111
      %s114 = sadd.s32 %s113, 1
      %p117 = scmp.eq.s32.totalorder %s16, 1
      %p118 = scmp.ne.s32.totalorder %s113, %s115
      %p119 = scmp.eq.s32.totalorder %s16, 0
      %p120 = por %p118, %p119
      %p121 = scmp.ne.s32.totalorder %s113, %s115
      %p122 = scmp.eq.s32.totalorder %s21, 1
      %p123 = por %p121, %p122
      %p124 = scmp.ne.s32.totalorder %s115, %s116
      %p125 = scmp.eq.s32.totalorder %s21, 0
      %p126 = por %p124, %p125
      %p127 = scmp.ne.s32.totalorder %s115, %s116
      %p128 = scmp.eq.s32.totalorder %s22, 1
      %p129 = por %p127, %p128
      %p131 = scmp.ne.s32.totalorder %s116, %s130
      %p132 = scmp.eq.s32.totalorder %s22, 0
      %p133 = por %p131, %p132
      %s135 = sadd.s32 %s134, 1
      %p138 = scmp.eq.s32.totalorder %s16, 1
      %p139 = scmp.ne.s32.totalorder %s134, %s136
      %p140 = scmp.eq.s32.totalorder %s16, 0
      %p141 = por %p139, %p140
      %p142 = scmp.ne.s32.totalorder %s134, %s136
      %p143 = scmp.eq.s32.totalorder %s21, 1
      %p144 = por %p142, %p143
      %p145 = scmp.ne.s32.totalorder %s136, %s137
      %p146 = scmp.eq.s32.totalorder %s21, 0
      %p147 = por %p145, %p146
      %p148 = scmp.ne.s32.totalorder %s136, %s137
      %p149 = scmp.eq.s32.totalorder %s22, 1
      %p150 = por %p148, %p149
      %p152 = scmp.ne.s32.totalorder %s137, %s151
      %p153 = scmp.eq.s32.totalorder %s22, 0
      %p154 = por %p152, %p153
      %s156 = sadd.s32 %s155, 1
      %p159 = scmp.eq.s32.totalorder %s16, 1
      %p160 = scmp.ne.s32.totalorder %s155, %s157
      %p161 = scmp.eq.s32.totalorder %s16, 0
      %p162 = por %p160, %p161
      %p163 = scmp.ne.s32.totalorder %s155, %s157
      %p164 = scmp.eq.s32.totalorder %s21, 1
      %p165 = por %p163, %p164
      %p166 = scmp.ne.s32.totalorder %s157, %s158
      %p167 = scmp.eq.s32.totalorder %s21, 0
      %p168 = por %p166, %p167
      %p169 = scmp.ne.s32.totalorder %s157, %s158
      %p170 = scmp.eq.s32.totalorder %s22, 1
      %p171 = por %p169, %p170
      %p173 = scmp.ne.s32.totalorder %s158, %s172
      %p174 = scmp.eq.s32.totalorder %s22, 0
      %p175 = por %p173, %p174
      %s176 = ssub.s32 %s16, %s23
      %p177 = scmp.eq.s32.totalorder %s176, 0
      %s179 = sadd.s32 %s178, 1
      %s180 = scalar_select %p177, %s178, %s179
      %p183 = pneg %p177
      %p184 = scmp.eq.s32.totalorder %s16, 1
      %p185 = por %p183, %p184
      %p186 = scmp.ne.s32.totalorder %s178, %s181
      %p187 = scmp.eq.s32.totalorder %s16, 0
      %p188 = por %p186, %p187
      %p189 = scmp.ne.s32.totalorder %s178, %s181
      %p190 = scmp.eq.s32.totalorder %s21, 1
      %p191 = por %p189, %p190
      %p192 = scmp.ne.s32.totalorder %s181, %s182
      %p193 = scmp.eq.s32.totalorder %s21, 0
      %p194 = por %p192, %p193
      %p195 = scmp.ne.s32.totalorder %s181, %s182
      %p196 = scmp.eq.s32.totalorder %s22, 1
      %p197 = por %p195, %p196
      %p199 = scmp.ne.s32.totalorder %s182, %s198
      %p200 = scmp.eq.s32.totalorder %s22, 0
      %p201 = por %p199, %p200
      %p202 = scmp.le.s32.totalorder 1, %s16
      %p203 = scmp.lt.s32.totalorder %s16, 3
      %p204 = pnand %p202, %p203
      %p205 = pneg %p204
      // Predicated region
      $region9: #{tpu_custom_call.1} parent=5 // pred_check
        _
      $region10: #{tpu_custom_call.1} parent=5 // pred_check_branch
        %207 = sbr.rel (%p204) target = $region12
      $region11: #{tpu_custom_call.1} parent=5 // pred_region
        %s208 = ssub.s32 %s16, 1
        // Predicated region
        $region13: #{tpu_custom_call.1} parent=11 // pred_check
          %p209 = pneg %p63
        $region14: #{tpu_custom_call.1} parent=11 // pred_check_branch
          %211 = sbr.rel (%p209) target = $region16
        $region15: #{tpu_custom_call.1} parent=11 // pred_region
          _
        $region16: #{tpu_custom_call.1} parent=11 // pred_fallthru
          _
        // Predicated region
        $region17: #{tpu_custom_call.1} parent=11 // pred_check
          %p212 = pneg %p84
        $region18: #{tpu_custom_call.1} parent=11 // pred_check_branch
          %214 = sbr.rel (%p212) target = $region20
        $region19: #{tpu_custom_call.1} parent=11 // pred_region
          _
        $region20: #{tpu_custom_call.1} parent=11 // pred_fallthru
          _
        // Predicated region
        $region21: #{tpu_custom_call.1} parent=11 // pred_check
          %p215 = pneg %p105
        $region22: #{tpu_custom_call.1} parent=11 // pred_check_branch
          %217 = sbr.rel (%p215) target = $region24
        $region23: #{tpu_custom_call.1} parent=11 // pred_region
          _
        $region24: #{tpu_custom_call.1} parent=11 // pred_fallthru
          _
        // Predicated region
        $region25: #{tpu_custom_call.1} parent=11 // pred_check
          %p218 = pneg %p126
        $region26: #{tpu_custom_call.1} parent=11 // pred_check_branch
          %220 = sbr.rel (%p218) target = $region28
        $region27: #{tpu_custom_call.1} parent=11 // pred_region
          _
        $region28: #{tpu_custom_call.1} parent=11 // pred_fallthru
          _
        // Predicated region
        $region29: #{tpu_custom_call.1} parent=11 // pred_check
          %p221 = pneg %p147
        $region30: #{tpu_custom_call.1} parent=11 // pred_check_branch
          %223 = sbr.rel (%p221) target = $region32
        $region31: #{tpu_custom_call.1} parent=11 // pred_region
          _
        $region32: #{tpu_custom_call.1} parent=11 // pred_fallthru
          _
        // Predicated region
        $region33: #{tpu_custom_call.1} parent=11 // pred_check
          %p224 = pneg %p168
        $region34: #{tpu_custom_call.1} parent=11 // pred_check_branch
          %226 = sbr.rel (%p224) target = $region36
        $region35: #{tpu_custom_call.1} parent=11 // pred_region
          _
        $region36: #{tpu_custom_call.1} parent=11 // pred_fallthru
          _
      $region12: #{tpu_custom_call.1} parent=5 // pred_fallthru
        _
      %p227 = scmp.lt.s32.totalorder %s16, 2
      // Predicated region
      $region37: #{tpu_custom_call.1} parent=5 // pred_check
        %p228 = pneg %p227
      $region38: #{tpu_custom_call.1} parent=5 // pred_check_branch
        %230 = sbr.rel (%p228) target = $region40
      $region39: #{tpu_custom_call.1} parent=5 // pred_region
        // Predicated region
        $region41: #{tpu_custom_call.1} parent=39 // pred_check
          %p231 = pneg %p36
        $region42: #{tpu_custom_call.1} parent=39 // pred_check_branch
          %233 = sbr.rel (%p231) target = $region44
        $region43: #{tpu_custom_call.1} parent=39 // pred_region
          %s234 = smul.u32 32, %s16
          %s235 = ssub.s32 38, %s234
          %p236 = scmp.lt.s32.totalorder %s235, 32
          %s237 = scalar_select %p236, %s235, 32
          %s238 = smul.u32 8, %s237
          %p239 = scmp.lt.s32.totalorder %s234, 37
          %s240 = scalar_select %p239, %s234, 37
          %s241 = smul.addr %s240, 8
          %s242 = scalar_lea.vmem %s0, %s241
          %s243 = smul.u32 32, %s16
          %s244 = ssub.s32 38, %s243
          %p245 = scmp.lt.s32.totalorder %s244, 32
          %s246 = scalar_select %p245, %s244, 32
          %s247 = smul.u32 8, %s246
        $region44: #{tpu_custom_call.1} parent=39 // pred_fallthru
          _
      $region40: #{tpu_custom_call.1} parent=5 // pred_fallthru
        _
      %p248 = scmp.le.s32.totalorder 1, %s16
      %p249 = scmp.lt.s32.totalorder %s16, 3
      %p250 = pnand %p248, %p249
      %p251 = pneg %p250
      // Predicated region
      $region45: #{tpu_custom_call.1} parent=5 // pred_check
        _
      $region46: #{tpu_custom_call.1} parent=5 // pred_check_branch
        %253 = sbr.rel (%p250) target = $region48
      $region47: #{tpu_custom_call.1} parent=5 // pred_region
        %s254 = ssub.s32 %s16, 1
        %s255 = smul.u32 32, %s21
        %s256 = ssub.s32 38, %s255
        %p257 = scmp.lt.s32.totalorder %s256, 32
        %s258 = scalar_select %p257, %s256, 32
        %s259 = smul.u32 8, %s258
        %p260 = scmp.lt.s32.totalorder %s255, 37
        %s261 = scalar_select %p260, %s255, 37
        %s262 = smul.addr %s261, 8
        %s263 = scalar_lea.vmem %s0, %s262
        %p264 = pneg %p42
        %p265 = pneg %p39
        %p266 = pneg %p63
        %p267 = pneg %p60
        %p268 = pneg %p84
        %p269 = pneg %p81
        %p270 = pneg %p105
        %p271 = pneg %p102
        %p272 = pneg %p126
        %p273 = pneg %p123
        %p274 = pneg %p147
        %p275 = pneg %p144
        %p276 = pneg %p168
        %p277 = pneg %p165
        %p278 = pneg %p194
        %p279 = pneg %p191
        %s280 = sand.u32 %s181, 1
        %s281 = scalar_lea.sflag [#allocation3], %s280
        %s282 = sand.u32 %s181, 1
        %s283 = smul.addr %s282, 4
        %s284 = scalar_lea.vmem [#allocation2], %s283
        %s285 = smul.u32 32, %s21
        %s286 = ssub.s32 38, %s285
        %p287 = scmp.lt.s32.totalorder %s286, 32
        %s288 = scalar_select %p287, %s286, 32
        %s289 = smul.u32 8, %s288
        %p290 = scmp.lt.s32.totalorder %s285, 37
        %s291 = scalar_select %p290, %s285, 37
        %s292 = smul.addr %s291, 8
        %s293 = scalar_lea.vmem %s0, %s292
        %s294 = smul.u32 32, %s21
        %s295 = ssub.s32 38, %s294
        %p296 = scmp.lt.s32.totalorder %s295, 32
        %s297 = scalar_select %p296, %s295, 32
        %s298 = smul.u32 8, %s297
        %s299 = smul.u32 2, %s21
        %s300 = ssub.s32 3, %s299
        %p301 = scmp.lt.s32.totalorder %s300, 2
        %s302 = scalar_select %p301, %s300, 2
        %s303 = smul.u32 2, %s302
        %v305 = vld [vmem:[%s293] sm:$0xff]
        %v306 = vld [vmem:[%s293 + $0x8] sm:$0xff]
        %v307 = vld [vmem:[%s293 + $0x10] sm:$0xff]
        %v308 = vld [vmem:[%s293 + $0x18] sm:$0xff]
        %v309 = vld [vmem:[%s293 + $0x20] sm:$0xff]
        %v310 = vld [vmem:[%s293 + $0x28] sm:$0xff]
        %v311 = vld [vmem:[%s293 + $0x30] sm:$0xff]
        %v312 = vld [vmem:[%s293 + $0x38] sm:$0xff]
        %v313 = vld [vmem:[%s293 + $0x40] sm:$0xff]
        %v314 = vld [vmem:[%s293 + $0x48] sm:$0xff]
        %v315 = vld [vmem:[%s293 + $0x50] sm:$0xff]
        %v316 = vld [vmem:[%s293 + $0x58] sm:$0xff]
        %v317 = vld [vmem:[%s293 + $0x60] sm:$0xff]
        %v318 = vld [vmem:[%s293 + $0x68] sm:$0xff]
        %v319 = vld [vmem:[%s293 + $0x70] sm:$0xff]
        %v320 = vld [vmem:[%s293 + $0x78] sm:$0xff]
        %v321 = vld [vmem:[%s293 + $0x80] sm:$0xff]
        %v322 = vld [vmem:[%s293 + $0x88] sm:$0xff]
        %v323 = vld [vmem:[%s293 + $0x90] sm:$0xff]
        %v324 = vld [vmem:[%s293 + $0x98] sm:$0xff]
        %v325 = vld [vmem:[%s293 + $0xa0] sm:$0xff]
        %v326 = vld [vmem:[%s293 + $0xa8] sm:$0xff]
        %v327 = vld [vmem:[%s293 + $0xb0] sm:$0xff]
        %v328 = vld [vmem:[%s293 + $0xb8] sm:$0xff]
        %v329 = vld [vmem:[%s293 + $0xc0] sm:$0xff]
        %v330 = vld [vmem:[%s293 + $0xc8] sm:$0xff]
        %v331 = vld [vmem:[%s293 + $0xd0] sm:$0xff]
        %v332 = vld [vmem:[%s293 + $0xd8] sm:$0xff]
        %v333 = vld [vmem:[%s293 + $0xe0] sm:$0xff]
        %v334 = vld [vmem:[%s293 + $0xe8] sm:$0xff]
        %v335 = vld [vmem:[%s293 + $0xf0] sm:$0xff]
        %v336 = vld [vmem:[%s293 + $0xf8] sm:$0xff]
        %v337 = vpack.c.bf16 %v306, %v305
        %v338 = vpack.c.bf16 %v308, %v307
        %v339 = vpack.c.bf16 %v310, %v309
        %v340 = vpack.c.bf16 %v312, %v311
        %v341 = vpack.c.bf16 %v314, %v313
        %v342 = vpack.c.bf16 %v316, %v315
        %v343 = vpack.c.bf16 %v318, %v317
        %v344 = vpack.c.bf16 %v320, %v319
        %v345 = vpack.c.bf16 %v322, %v321
        %v346 = vpack.c.bf16 %v324, %v323
        %v347 = vpack.c.bf16 %v326, %v325
        %v348 = vpack.c.bf16 %v328, %v327
        %v349 = vpack.c.bf16 %v330, %v329
        %v350 = vpack.c.bf16 %v332, %v331
        %v351 = vpack.c.bf16 %v334, %v333
        %v352 = vpack.c.bf16 %v336, %v335
        %v353 = vld [vmem:[%s1] sm:$0xf]
        %v354 = vld [vmem:[%s1 + $0x4] sm:$0xf]
        %v355 = vld [vmem:[%s1 + $0x8] sm:$0xf]
        %v356 = vld [vmem:[%s1 + $0xc] sm:$0xf]
        %v357 = vld [vmem:[%s1 + $0x10] sm:$0xf]
        %v358 = vld [vmem:[%s1 + $0x14] sm:$0xf]
        %v359 = vld [vmem:[%s1 + $0x18] sm:$0xf]
        %v360 = vld [vmem:[%s1 + $0x1c] sm:$0xf]
        %v361 = vld [vmem:[%s2] sm:$0xff]
        %v362 = vld [vmem:[%s2 + $0x8] sm:$0xff]
        %v363 = vld [vmem:[%s2 + $0x10] sm:$0xff]
        %v364 = vld [vmem:[%s2 + $0x18] sm:$0xff]
        %v365 = vld [vmem:[%s2 + $0x20] sm:$0xff]
        %v366 = vld [vmem:[%s2 + $0x28] sm:$0xff]
        %v367 = vld [vmem:[%s2 + $0x30] sm:$0xff]
        %v368 = vld [vmem:[%s2 + $0x38] sm:$0xff]
        %370 = vset.pattern.permute.xlu0 0
        %371 = vperm.xlu0 %370, %v361
        %v372 = vpop.permute.xlu0 %371
        %375 = vset.pattern.permute.xlu0 0
        %376 = vperm.xlu0 %375, %v362
        %v377 = vpop.permute.xlu0 %376
        %380 = vset.pattern.permute.xlu0 0
        %381 = vperm.xlu0 %380, %v363
        %v382 = vpop.permute.xlu0 %381
        %385 = vset.pattern.permute.xlu0 0
        %386 = vperm.xlu0 %385, %v364
        %v387 = vpop.permute.xlu0 %386
        %390 = vset.pattern.permute.xlu0 0
        %391 = vperm.xlu0 %390, %v365
        %v392 = vpop.permute.xlu0 %391
        %395 = vset.pattern.permute.xlu0 0
        %396 = vperm.xlu0 %395, %v366
        %v397 = vpop.permute.xlu0 %396
        %400 = vset.pattern.permute.xlu0 0
        %401 = vperm.xlu0 %400, %v367
        %v402 = vpop.permute.xlu0 %401
        %405 = vset.pattern.permute.xlu0 0
        %406 = vperm.xlu0 %405, %v368
        %v407 = vpop.permute.xlu0 %406
        %v417 = vunpack.c.l.b16 %v353
        %v418 = vunpack.c.l.b16 %v354
        %v419 = vunpack.c.l.b16 %v355
        %v420 = vunpack.c.l.b16 %v356
        %v421 = vunpack.c.l.b16 %v357
        %v422 = vunpack.c.l.b16 %v358
        %v423 = vunpack.c.l.b16 %v359
        %v424 = vunpack.c.l.b16 %v360
        %v425 = vpack.c.b16 %v418, %v417
        %v426 = vpack.c.b16 %v420, %v419
        %v427 = vpack.c.b16 %v422, %v421
        %v428 = vpack.c.b16 %v424, %v423
        %vm429 = vcmask 261120
        %v431 = vsel %vm429, %v425, 0
        %v434 = vsel %vm429, %v426, 0
        %v437 = vsel %vm429, %v427, 0
        %v440 = vsel %vm429, %v428, 0
        %v443 = vsel %vm429, %v337, 0
        %v446 = vsel %vm429, %v338, 0
        %v449 = vsel %vm429, %v339, 0
        %v452 = vsel %vm429, %v340, 0
        %v455 = vsel %vm429, %v341, 0
        %v458 = vsel %vm429, %v342, 0
        %v461 = vsel %vm429, %v343, 0
        %v464 = vsel %vm429, %v344, 0
        %v467 = vsel %vm429, %v345, 0
        %v470 = vsel %vm429, %v346, 0
        %v473 = vsel %vm429, %v347, 0
        %v476 = vsel %vm429, %v348, 0
        %v479 = vsel %vm429, %v349, 0
        %v482 = vsel %vm429, %v350, 0
        %v485 = vsel %vm429, %v351, 0
        %v488 = vsel %vm429, %v352, 0
        %490 = vmatpush.bf16.xpose.msra.mxu0 %v464
        %491 = vmatpush.bf16.xpose.msra.mxu0 %v461
        %492 = vmatpush.bf16.xpose.msra.mxu0 %v458
        %493 = vmatpush.bf16.xpose.msra.mxu0 %v455
        %494 = vmatpush.bf16.xpose.msra.mxu0 %v452
        %495 = vmatpush.bf16.xpose.msra.mxu0 %v449
        %496 = vmatpush.bf16.xpose.msra.mxu0 %v446
        %497 = vmatpush.bf16.xpose.msra.mxu0 %v443
        %498 = vmatmul.bf16.gmra.mxu0 %v431
        %v499 = vpop.f32.mrf.mxu0
        %v500 = vadd.f32 %v372, %v499
        %v501 = vpop.f32.mrf.mxu0
        %v502 = vadd.f32 %v377, %v501
        %503 = vmatmul.bf16.gmra.mxu0 %v434
        %v504 = vpop.f32.mrf.mxu0
        %v505 = vadd.f32 %v382, %v504
        %v506 = vpop.f32.mrf.mxu0
        %v507 = vadd.f32 %v387, %v506
        %508 = vmatmul.bf16.gmra.mxu0 %v437
        %v509 = vpop.f32.mrf.mxu0
        %v510 = vadd.f32 %v392, %v509
        %v511 = vpop.f32.mrf.mxu0
        %v512 = vadd.f32 %v397, %v511
        %513 = vmatmul.bf16.gmra.mxu0 %v440
        %v514 = vpop.f32.mrf.mxu0
        %v515 = vadd.f32 %v402, %v514
        %v516 = vpop.f32.mrf.mxu0
        %v517 = vadd.f32 %v407, %v516
        %518 = vdwg.mxu0
        %519 = vmatpush.bf16.xpose.msra.mxu0 %v488
        %520 = vmatpush.bf16.xpose.msra.mxu0 %v485
        %521 = vmatpush.bf16.xpose.msra.mxu0 %v482
        %522 = vmatpush.bf16.xpose.msra.mxu0 %v479
        %523 = vmatpush.bf16.xpose.msra.mxu0 %v476
        %524 = vmatpush.bf16.xpose.msra.mxu0 %v473
        %525 = vmatpush.bf16.xpose.msra.mxu0 %v470
        %526 = vmatpush.bf16.xpose.msra.mxu0 %v467
        %527 = vmatmul.bf16.gmra.mxu0 %v431
        %v528 = vpop.f32.mrf.mxu0
        %v529 = vadd.f32 %v372, %v528
        %v530 = vpop.f32.mrf.mxu0
        %v531 = vadd.f32 %v377, %v530
        %532 = vmatmul.bf16.gmra.mxu0 %v434
        %v533 = vpop.f32.mrf.mxu0
        %v534 = vadd.f32 %v382, %v533
        %v535 = vpop.f32.mrf.mxu0
        %v536 = vadd.f32 %v387, %v535
        %537 = vmatmul.bf16.gmra.mxu0 %v437
        %v538 = vpop.f32.mrf.mxu0
        %v539 = vadd.f32 %v392, %v538
        %v540 = vpop.f32.mrf.mxu0
        %v541 = vadd.f32 %v397, %v540
        %542 = vmatmul.bf16.gmra.mxu0 %v440
        %v543 = vpop.f32.mrf.mxu0
        %v544 = vadd.f32 %v402, %v543
        %v545 = vpop.f32.mrf.mxu0
        %v546 = vadd.f32 %v407, %v545
        %547 = vdwg.mxu0
        %v548 = vmax.f32 %v500, 0.0
        %v549 = vmax.f32 %v529, 0.0
        %v550 = vmax.f32 %v502, 0.0
        %v551 = vmax.f32 %v531, 0.0
        %v552 = vmax.f32 %v505, 0.0
        %v553 = vmax.f32 %v534, 0.0
        %v554 = vmax.f32 %v507, 0.0
        %v555 = vmax.f32 %v536, 0.0
        %v556 = vmax.f32 %v510, 0.0
        %v557 = vmax.f32 %v539, 0.0
        %v558 = vmax.f32 %v512, 0.0
        %v559 = vmax.f32 %v541, 0.0
        %v560 = vmax.f32 %v515, 0.0
        %v561 = vmax.f32 %v544, 0.0
        %v562 = vmax.f32 %v517, 0.0
        %v563 = vmax.f32 %v546, 0.0
        %v564 = vld [vmem:[%s3] sm:$0xf]
        %v565 = vld [vmem:[%s3 + $0x4] sm:$0xf]
        %v566 = vld [vmem:[%s3 + $0x8] sm:$0xf]
        %v567 = vld [vmem:[%s3 + $0xc] sm:$0xf]
        %v568 = vld [vmem:[%s3 + $0x10] sm:$0xf]
        %v569 = vld [vmem:[%s3 + $0x14] sm:$0xf]
        %v570 = vld [vmem:[%s3 + $0x18] sm:$0xf]
        %v571 = vld [vmem:[%s3 + $0x1c] sm:$0xf]
        %v572 = vpack.c.bf16 %v550, %v548
        %v573 = vpack.c.bf16 %v551, %v549
        %v574 = vpack.c.bf16 %v554, %v552
        %v575 = vpack.c.bf16 %v555, %v553
        %v576 = vpack.c.bf16 %v558, %v556
        %v577 = vpack.c.bf16 %v559, %v557
        %v578 = vpack.c.bf16 %v562, %v560
        %v579 = vpack.c.bf16 %v563, %v561
        %v580 = vld [vmem:[%s4] sm:$0xff]
        %v581 = vld [vmem:[%s4 + $0x8] sm:$0xff]
        %v582 = vld [vmem:[%s4 + $0x10] sm:$0xff]
        %v583 = vld [vmem:[%s4 + $0x18] sm:$0xff]
        %v584 = vld [vmem:[%s4 + $0x20] sm:$0xff]
        %v585 = vld [vmem:[%s4 + $0x28] sm:$0xff]
        %v586 = vld [vmem:[%s4 + $0x30] sm:$0xff]
        %v587 = vld [vmem:[%s4 + $0x38] sm:$0xff]
        %589 = vset.pattern.permute.xlu0 0
        %590 = vperm.xlu0 %589, %v580
        %v591 = vpop.permute.xlu0 %590
        %594 = vset.pattern.permute.xlu0 0
        %595 = vperm.xlu0 %594, %v581
        %v596 = vpop.permute.xlu0 %595
        %599 = vset.pattern.permute.xlu0 0
        %600 = vperm.xlu0 %599, %v582
        %v601 = vpop.permute.xlu0 %600
        %604 = vset.pattern.permute.xlu0 0
        %605 = vperm.xlu0 %604, %v583
        %v606 = vpop.permute.xlu0 %605
        %609 = vset.pattern.permute.xlu0 0
        %610 = vperm.xlu0 %609, %v584
        %v611 = vpop.permute.xlu0 %610
        %614 = vset.pattern.permute.xlu0 0
        %615 = vperm.xlu0 %614, %v585
        %v616 = vpop.permute.xlu0 %615
        %619 = vset.pattern.permute.xlu0 0
        %620 = vperm.xlu0 %619, %v586
        %v621 = vpop.permute.xlu0 %620
        %624 = vset.pattern.permute.xlu0 0
        %625 = vperm.xlu0 %624, %v587
        %v626 = vpop.permute.xlu0 %625
        %v636 = vunpack.c.l.b16 %v564
        %v637 = vunpack.c.l.b16 %v565
        %v638 = vunpack.c.l.b16 %v566
        %v639 = vunpack.c.l.b16 %v567
        %v640 = vunpack.c.l.b16 %v568
        %v641 = vunpack.c.l.b16 %v569
        %v642 = vunpack.c.l.b16 %v570
        %v643 = vunpack.c.l.b16 %v571
        %v644 = vpack.c.b16 %v637, %v636
        %v645 = vpack.c.b16 %v639, %v638
        %v646 = vpack.c.b16 %v641, %v640
        %v647 = vpack.c.b16 %v643, %v642
        %vm648 = vcmask 523264
        %v650 = vsel %vm648, %v644, 0
        %v653 = vsel %vm648, %v645, 0
        %v656 = vsel %vm648, %v646, 0
        %v659 = vsel %vm648, %v647, 0
        %661 = vmatpush.bf16.msra.mxu0 0
        %662 = vmatpush.bf16.msra.mxu0 0
        %663 = vmatpush.bf16.msra.mxu0 0
        %664 = vmatpush.bf16.msra.mxu0 0
        %665 = vmatpush.bf16.msra.mxu0 %v578
        %666 = vmatpush.bf16.msra.mxu0 %v576
        %667 = vmatpush.bf16.msra.mxu0 %v574
        %668 = vmatpush.bf16.msra.mxu0 %v572
        %669 = vmatmul.bf16.gmra.mxu0 %v650
        %v670 = vpop.f32.mrf.mxu0
        %v671 = vadd.f32 %v591, %v670
        %v672 = vpop.f32.mrf.mxu0
        %v673 = vadd.f32 %v596, %v672
        %674 = vmatmul.bf16.gmra.mxu0 %v653
        %v675 = vpop.f32.mrf.mxu0
        %v676 = vadd.f32 %v601, %v675
        %v677 = vpop.f32.mrf.mxu0
        %v678 = vadd.f32 %v606, %v677
        %679 = vmatmul.bf16.gmra.mxu0 %v656
        %v680 = vpop.f32.mrf.mxu0
        %v681 = vadd.f32 %v611, %v680
        %v682 = vpop.f32.mrf.mxu0
        %v683 = vadd.f32 %v616, %v682
        %684 = vmatmul.bf16.gmra.mxu0 %v659
        %v685 = vpop.f32.mrf.mxu0
        %v686 = vadd.f32 %v621, %v685
        %v687 = vpop.f32.mrf.mxu0
        %v688 = vadd.f32 %v626, %v687
        %689 = vdwg.mxu0
        %690 = vmatpush.bf16.msra.mxu0 0
        %691 = vmatpush.bf16.msra.mxu0 0
        %692 = vmatpush.bf16.msra.mxu0 0
        %693 = vmatpush.bf16.msra.mxu0 0
        %694 = vmatpush.bf16.msra.mxu0 %v579
        %695 = vmatpush.bf16.msra.mxu0 %v577
        %696 = vmatpush.bf16.msra.mxu0 %v575
        %697 = vmatpush.bf16.msra.mxu0 %v573
        %698 = vmatmul.bf16.gmra.mxu0 %v650
        %v699 = vpop.f32.mrf.mxu0
        %v700 = vadd.f32 %v591, %v699
        %v701 = vpop.f32.mrf.mxu0
        %v702 = vadd.f32 %v596, %v701
        %703 = vmatmul.bf16.gmra.mxu0 %v653
        %v704 = vpop.f32.mrf.mxu0
        %v705 = vadd.f32 %v601, %v704
        %v706 = vpop.f32.mrf.mxu0
        %v707 = vadd.f32 %v606, %v706
        %708 = vmatmul.bf16.gmra.mxu0 %v656
        %v709 = vpop.f32.mrf.mxu0
        %v710 = vadd.f32 %v611, %v709
        %v711 = vpop.f32.mrf.mxu0
        %v712 = vadd.f32 %v616, %v711
        %713 = vmatmul.bf16.gmra.mxu0 %v659
        %v714 = vpop.f32.mrf.mxu0
        %v715 = vadd.f32 %v621, %v714
        %v716 = vpop.f32.mrf.mxu0
        %v717 = vadd.f32 %v626, %v716
        %718 = vdwg.mxu0
        %v719 = vmax.f32 %v671, 0.0
        %v720 = vmax.f32 %v700, 0.0
        %v721 = vmax.f32 %v673, 0.0
        %v722 = vmax.f32 %v702, 0.0
        %v723 = vmax.f32 %v676, 0.0
        %v724 = vmax.f32 %v705, 0.0
        %v725 = vmax.f32 %v678, 0.0
        %v726 = vmax.f32 %v707, 0.0
        %v727 = vmax.f32 %v681, 0.0
        %v728 = vmax.f32 %v710, 0.0
        %v729 = vmax.f32 %v683, 0.0
        %v730 = vmax.f32 %v712, 0.0
        %v731 = vmax.f32 %v686, 0.0
        %v732 = vmax.f32 %v715, 0.0
        %v733 = vmax.f32 %v688, 0.0
        %v734 = vmax.f32 %v717, 0.0
        %v735 = vld [vmem:[%s5] sm:$0x1]
        %v736 = vpack.c.bf16 %v721, %v719
        %v737 = vpack.c.bf16 %v722, %v720
        %v738 = vpack.c.bf16 %v725, %v723
        %v739 = vpack.c.bf16 %v726, %v724
        %v740 = vpack.c.bf16 %v729, %v727
        %v741 = vpack.c.bf16 %v730, %v728
        %v742 = vpack.c.bf16 %v733, %v731
        %v743 = vpack.c.bf16 %v734, %v732
        %v744 = vld [vmem:[%s6] sm:$0x3]
        %746 = vset.pattern.permute.xlu0 0
        %747 = vperm.xlu0 %746, %v744
        %v748 = vpop.permute.xlu0 %747
        %v751 = vsel %vm648, %v735, 0
        %753 = vmatpush.bf16.msra.mxu0 0
        %754 = vmatpush.bf16.msra.mxu0 0
        %755 = vmatpush.bf16.msra.mxu0 0
        %756 = vmatpush.bf16.msra.mxu0 0
        %757 = vmatpush.bf16.msra.mxu0 %v742
        %758 = vmatpush.bf16.msra.mxu0 %v740
        %759 = vmatpush.bf16.msra.mxu0 %v738
        %760 = vmatpush.bf16.msra.mxu0 %v736
        %761 = vmatmul.bf16.gmra.mxu0 %v751
        %v762 = vpop.f32.mrf.mxu0
        %v763 = vadd.f32 %v748, %v762
        %v764 = vpop.f32.mrf.mxu0
        %765 = vdwg.mxu0
        %766 = vmatpush.bf16.msra.mxu0 0
        %767 = vmatpush.bf16.msra.mxu0 0
        %768 = vmatpush.bf16.msra.mxu0 0
        %769 = vmatpush.bf16.msra.mxu0 0
        %770 = vmatpush.bf16.msra.mxu0 %v743
        %771 = vmatpush.bf16.msra.mxu0 %v741
        %772 = vmatpush.bf16.msra.mxu0 %v739
        %773 = vmatpush.bf16.msra.mxu0 %v737
        %774 = vmatmul.bf16.gmra.mxu0 %v751
        %v775 = vpop.f32.mrf.mxu0
        %v776 = vadd.f32 %v748, %v775
        %v777 = vpop.f32.mrf.mxu0
        %778 = vdwg.mxu0
        %v781 = vrot.slane %v776, 6
        %vm782 = vcmask 1041408
        %v783 = vsel %vm782, %v763, %v781
        %785 = vst [vmem:[%s284] sm:$0xf] %v783
        %s786 = sand.u32 %s181, 1
        %s787 = scalar_lea.sflag [#allocation3], %s786
        %s788 = sand.u32 %s181, 1
        %s789 = smul.addr %s788, 4
        %s790 = scalar_lea.vmem [#allocation2], %s789
        // Predicated region
        $region49: #{tpu_custom_call.1} parent=47 // pred_check
          %p791 = pneg %p191
        $region50: #{tpu_custom_call.1} parent=47 // pred_check_branch
          %793 = sbr.rel (%p791) target = $region52
        $region51: #{tpu_custom_call.1} parent=47 // pred_region
          %s794 = smul.u32 2, %s21
          %s795 = ssub.s32 3, %s794
          %p796 = scmp.lt.s32.totalorder %s795, 2
          %s797 = scalar_select %p796, %s795, 2
          %s798 = smul.u32 2, %s797
          %s799 = ssub.s32 4, %s798
          %s800 = sshll.u32 %s799, 4
          %801 = vsyncadd %s787, %s800
          %p802 = scmp.ne.s32.totalorder 0, %s798
          %s803 = smul.addr %s794, 2
          %s804 = scalar_lea.hbm %s7, %s803
          %s805 = smul.u32 %s797, 2
          %s806 = sshll.u32 %s805, 4
          %s807 = sshll.u32 %s790, 4
          %s808 = int_to_ptr.vmem [resolvable:$true] %s807
          %s809 = sshll.u32 %s804, 4
          %s810 = int_to_ptr.hbm [resolvable:$true] %s809
          %812 = dma.vmem_to_hbm [thread:$0]  (%p802), %s808, %s806, %s810, %s787
        $region52: #{tpu_custom_call.1} parent=47 // pred_fallthru
          _
      $region48: #{tpu_custom_call.1} parent=5 // pred_fallthru
        _
      %p813 = scmp.le.s32.totalorder 2, %s16
      // Predicated region
      $region53: #{tpu_custom_call.1} parent=5 // pred_check
        %p814 = pneg %p813
      $region54: #{tpu_custom_call.1} parent=5 // pred_check_branch
        %816 = sbr.rel (%p814) target = $region56
      $region55: #{tpu_custom_call.1} parent=5 // pred_region
        %s817 = ssub.s32 %s16, 2
        // Predicated region
        $region57: #{tpu_custom_call.1} parent=55 // pred_check
          %p818 = pneg %p197
        $region58: #{tpu_custom_call.1} parent=55 // pred_check_branch
          %820 = sbr.rel (%p818) target = $region60
        $region59: #{tpu_custom_call.1} parent=55 // pred_region
          %s821 = sand.u32 %s182, 1
          %s822 = scalar_lea.sflag [#allocation3], %s821
          %s823 = sand.u32 %s182, 1
          %s824 = smul.addr %s823, 4
          %s825 = scalar_lea.vmem [#allocation2], %s824
          %827 = dma.done %s822, 64
        $region60: #{tpu_custom_call.1} parent=55 // pred_fallthru
          _
      $region56: #{tpu_custom_call.1} parent=5 // pred_fallthru
        _
    $region6: #{tpu_custom_call.1} parent=1 // loop_footer
      %s20 = sadd.s32 1, %s16
    $region7: #{tpu_custom_call.1} parent=1 // loop_footer_branch
      %15 = sbr.rel target = $region3
    $region8: #{tpu_custom_call.1} parent=1 // loop_exit
      _
    %828 = vsyncpa [#allocation3], 1
    %s829 = scalar_lea.sflag [#allocation3], 1
    %830 = vsyncpa %s829, 1

</llo_original>
